<compile_context>
chip_gen: v5e
topology: v5e:2x2
jax: 0.10.0
libtpu: 0.0.40
codegen_flags: <defaults>
</compile_context>

<pallas_src>
import functools

import jax
import jax.numpy as jnp
from jax.experimental import pallas as pl
from jax.experimental.pallas import tpu as pltpu


def _round_up(x, m):
    return ((x + m - 1) // m) * m


def _vmem_limit_bytes():
    """Generation-aware scoped-VMEM request (half of physical, clamped)."""
    try:
        info = pltpu.get_tpu_info()
        cap = int(getattr(info, "vmem_capacity_bytes", 128 * 1024 * 1024))
    except Exception:
        cap = 64 * 1024 * 1024
    return int(min(max(cap // 2, 32 * 1024 * 1024), 100 * 1024 * 1024))


# ----------------------------- k == 1 kernels --------------------------------
def _k1_fused_kernel(x_ref, w_ref, g_ref, b_ref, o_ref, *, eps):
    """Whole problem VMEM-resident: 1x1 conv + batch stats + BN + SiLU, one pass."""
    B = x_ref.shape[0]
    count = x_ref.shape[0] * x_ref.shape[2]
    w = w_ref[...]                                   # (C2, C1)
    C2 = w.shape[0]
    s1 = jnp.zeros((C2, 1), jnp.float32)
    s2 = jnp.zeros((C2, 1), jnp.float32)
    ys = []
    for bi in range(B):                              # B is small on this path
        y = jnp.dot(w, x_ref[bi], preferred_element_type=jnp.float32)   # (C2, M)
        s1 = s1 + jnp.sum(y, axis=1, keepdims=True)
        s2 = s2 + jnp.sum(y * y, axis=1, keepdims=True)
        ys.append(y)
    inv_n = 1.0 / float(count)
    mean = s1 * inv_n
    # TODO(synk): one-pass variance can cancel for large, non-zero-mean y; clamp
    # guards NaN but a shifted two-pass accumulation would be tighter.
    var = jnp.maximum(s2 * inv_n - mean * mean, 0.0)
    scale = g_ref[...] * jax.lax.rsqrt(var + eps)
    shift = b_ref[...] - mean * scale
    for bi in range(B):
        z = ys[bi] * scale + shift
        o_ref[bi] = (z * jax.nn.sigmoid(z)).astype(o_ref.dtype)


def _k1_stats_kernel(x_ref, w_ref, sum_ref, sq_ref, *, TM, M, n_m, off):
    """Per (core-slot, batch, M-tile): 1x1 conv matmul + masked per-channel sums."""
    nc = pl.program_id(0)
    b = pl.program_id(1)
    m = pl.program_id(2)

    @pl.when((b == 0) & (m == 0))
    def _init():
        sum_ref[...] = jnp.zeros_like(sum_ref)
        sq_ref[...] = jnp.zeros_like(sq_ref)

    t = nc * off + m                                  # global spatial tile index
    y = jnp.dot(w_ref[...], x_ref[...], preferred_element_type=jnp.float32)  # (C2, TM)
    col = t * TM + jax.lax.broadcasted_iota(jnp.int32, (1, TM), 1)
    owned = t >= nc * n_m                             # dedup of core-overlap tile
    valid = jnp.logical_and(col < M, owned)           # + ragged last-tile mask
    y = jnp.where(valid, y, 0.0)
    sum_ref[...] += jnp.sum(y, axis=1, keepdims=True)
    sq_ref[...] += jnp.sum(y * y, axis=1, keepdims=True)


def _k1_apply_kernel(x_ref, w_ref, scale_ref, shift_ref, o_ref):
    """Per (batch, M-tile): recompute 1x1 conv, apply folded BN + SiLU, lane-dense store."""
    y = jnp.dot(w_ref[...], x_ref[...], preferred_element_type=jnp.float32)
    z = y * scale_ref[...] + shift_ref[...]
    o_ref[...] = (z * jax.nn.sigmoid(z)).astype(o_ref.dtype)


def _k1_x_map(off):
    def imap(nc, b, m):
        return (b, 0, nc * off + m)
    return imap


# ----------------------------- k > 1 kernels ---------------------------------
def _row_map(i):
    def imap(b, h):
        return (b, h + i, 0, 0)
    return imap


def _kk_conv_row(x_refs, w_ref, k, Wo):
    """In-kernel im2col: k row slabs of padded NHWC input, k*k shifted matmuls."""
    acc = None
    for i in range(k):
        xi = x_refs[i][...]                           # (Wp, C1)
        for j in range(k):
            xij = xi[j:j + Wo, :]                     # (Wo, C1), static slice
            wij = w_ref[i * k + j]                    # (C1, C2)
            r = jnp.dot(xij, wij, preferred_element_type=jnp.float32)
            acc = r if acc is None else acc + r
    return acc                                        # (Wo, C2) f32


def _kk_stats_kernel(*refs, k, Wo):
    x_refs = refs[:k]
    w_ref, sum_ref, sq_ref = refs[k], refs[k + 1], refs[k + 2]
    b = pl.program_id(0)
    h = pl.program_id(1)

    @pl.when((b == 0) & (h == 0))
    def _init():
        sum_ref[...] = jnp.zeros_like(sum_ref)
        sq_ref[...] = jnp.zeros_like(sq_ref)

    y = _kk_conv_row(x_refs, w_ref, k, Wo)            # (Wo, C2), all entries valid
    sum_ref[...] += jnp.sum(y, axis=0, keepdims=True)
    sq_ref[...] += jnp.sum(y * y, axis=0, keepdims=True)


def _kk_apply_kernel(*refs, k, Wo):
    x_refs = refs[:k]
    w_ref, scale_ref, shift_ref, o_ref = refs[k], refs[k + 1], refs[k + 2], refs[k + 3]
    y = _kk_conv_row(x_refs, w_ref, k, Wo)
    z = y * scale_ref[...] + shift_ref[...]
    o_ref[...] = (z * jax.nn.sigmoid(z)).astype(o_ref.dtype)


# --------------------------------- wrappers -----------------------------------
def _forward_1x1(x, weight, gamma, beta, *, s, p, eps, force_general, max_tm,
                 vmem_limit):
    B, C1, H, W = x.shape
    C2 = weight.shape[0]
    out_dtype = x.dtype

    xw = x
    if p > 0:
        xw = jnp.pad(xw, ((0, 0), (0, 0), (p, p), (p, p)))
    if s > 1:
        xw = xw[:, :, ::s, ::s]
    Ho, Wo = xw.shape[2], xw.shape[3]
    M = Ho * Wo
    xr = xw.reshape(B, C1, M)                         # contiguous reshape: free
    w2 = weight.reshape(C2, C1).astype(x.dtype)
    g2 = gamma.astype(jnp.float32).reshape(C2, 1)
    b2 = beta.astype(jnp.float32).reshape(C2, 1)

    xb = jnp.dtype(x.dtype).itemsize
    ob = jnp.dtype(out_dtype).itemsize
    laneM = _round_up(M, 128)
    sub = lambda c: _round_up(c, 8)

    # ---- fast path: whole problem resident, single kernel, x read once.
    fast_bytes = (B * sub(C1) * laneM * xb
                  + B * sub(C2) * laneM * (4 + ob) + (1 << 16))
    fast_thresh = min(vmem_limit // 2, 24 * 1024 * 1024)
    if (not force_general) and fast_bytes <= fast_thresh and B <= 16:
        out = pl.pallas_call(
            functools.partial(_k1_fused_kernel, eps=eps),
            out_shape=jax.ShapeDtypeStruct((B, C2, M), out_dtype),
            compiler_params=pltpu.CompilerParams(vmem_limit_bytes=vmem_limit),
        )(xr, w2, g2, b2)
        return out.reshape(B, C2, Ho, Wo)

    # ---- general path: (stats pass) + (recompute + BN + SiLU pass).
    # TODO(synk): for strongly channel-reducing 1x1 convs (C2 << C1) writing the
    # conv result once would beat recompute; add that gate if such shapes matter.
    budget = vmem_limit // 2
    TM = 128
    for cand in (32768, 16384, 8192, 4096, 2048, 1024, 512, 256, 128):
        if cand > laneM and cand != 128:
            continue
        per = (2 * sub(C1) * cand * xb + sub(C2) * cand * 4
               + 2 * sub(C2) * cand * ob + (1 << 16))
        if per <= budget:
            TM = cand
            break
    if max_tm is not None:
        TM = max(128, min(TM, (max_tm // 128) * 128))

    n_mt = -(-M // TM)                                # number of spatial tiles
    NC = 2 if n_mt >= 2 else 1                        # TensorCore split of stats
    n_m = -(-n_mt // NC)                              # tiles per core slot
    off = n_mt - n_m                                  # core-1 start tile (in-bounds)

    s_sum, s_sq = pl.pallas_call(
        functools.partial(_k1_stats_kernel, TM=TM, M=M, n_m=n_m, off=off),
        out_shape=(jax.ShapeDtypeStruct((NC, C2, 1), jnp.float32),
                   jax.ShapeDtypeStruct((NC, C2, 1), jnp.float32)),
        grid_spec=pltpu.PrefetchScalarGridSpec(
            num_scalar_prefetch=0,
            grid=(NC, B, n_m),
            in_specs=[
                pl.BlockSpec((None, C1, TM), _k1_x_map(off)),
                pl.BlockSpec((C2, C1), lambda nc, b, m: (0, 0)),
            ],
            out_specs=(
                pl.BlockSpec((None, C2, 1), lambda nc, b, m: (nc, 0, 0)),
                pl.BlockSpec((None, C2, 1), lambda nc, b, m: (nc, 0, 0)),
            ),
        ),
        compiler_params=pltpu.CompilerParams(
            dimension_semantics=("parallel", "arbitrary", "arbitrary"),
            vmem_limit_bytes=vmem_limit),
    )(xr, w2)

    inv_n = 1.0 / float(B * M)
    mean = jnp.sum(s_sum, axis=0) * inv_n                                   # (C2, 1)
    var = jnp.maximum(jnp.sum(s_sq, axis=0) * inv_n - mean * mean, 0.0)
    scale = g2 * jax.lax.rsqrt(var + eps)
    shift = b2 - mean * scale

    out = pl.pallas_call(
        _k1_apply_kernel,
        out_shape=jax.ShapeDtypeStruct((B, C2, M), out_dtype),
        grid_spec=pltpu.PrefetchScalarGridSpec(
            num_scalar_prefetch=0,
            grid=(B, n_mt),
            in_specs=[
                pl.BlockSpec((None, C1, TM), lambda b, m: (b, 0, m)),
                pl.BlockSpec((C2, C1), lambda b, m: (0, 0)),
                pl.BlockSpec((C2, 1), lambda b, m: (0, 0)),
                pl.BlockSpec((C2, 1), lambda b, m: (0, 0)),
            ],
            out_specs=pl.BlockSpec((None, C2, TM), lambda b, m: (b, 0, m)),
        ),
        compiler_params=pltpu.CompilerParams(
            dimension_semantics=("parallel", "parallel"),
            vmem_limit_bytes=vmem_limit),
    )(xr, w2, scale, shift)
    return out.reshape(B, C2, Ho, Wo)


def _forward_kxk(x, weight, gamma, beta, *, k, p, eps, vmem_limit):
    B, C1, H, W = x.shape
    C2 = weight.shape[0]
    out_dtype = x.dtype

    # One NHWC transpose + spatial zero-pad of the input in HBM; no im2col matrix.
    # TODO(synk): fold the NCHW->NHWC transpose / pad and the final NHWC->NCHW
    # transpose into the kernels (boundary masking + transposed output BlockSpec).
    x_pad = jnp.pad(jnp.transpose(x, (0, 2, 3, 1)),
                    ((0, 0), (p, p), (p, p), (0, 0)))
    Hp, Wp = x_pad.shape[1], x_pad.shape[2]
    Ho = Hp - k + 1
    Wo = Wp - k + 1
    w_k = jnp.transpose(weight, (2, 3, 1, 0)).reshape(k * k, C1, C2).astype(x.dtype)
    g2 = gamma.astype(jnp.float32).reshape(1, C2)
    b2 = beta.astype(jnp.float32).reshape(1, C2)

    x_specs = [pl.BlockSpec((None, None, Wp, C1), _row_map(i)) for i in range(k)]
    w_spec = pl.BlockSpec((k * k, C1, C2), lambda b, h: (0, 0, 0))
    xs_args = (x_pad,) * k

    # TODO(synk): add the 2-TensorCore row split (as in the k==1 stats pass) here too.
    s_sum, s_sq = pl.pallas_call(
        functools.partial(_kk_stats_kernel, k=k, Wo=Wo),
        out_shape=(jax.ShapeDtypeStruct((1, C2), jnp.float32),
                   jax.ShapeDtypeStruct((1, C2), jnp.float32)),
        grid_spec=pltpu.PrefetchScalarGridSpec(
            num_scalar_prefetch=0,
            grid=(B, Ho),
            in_specs=x_specs + [w_spec],
            out_specs=(pl.BlockSpec((1, C2), lambda b, h: (0, 0)),
                       pl.BlockSpec((1, C2), lambda b, h: (0, 0))),
        ),
        compiler_params=pltpu.CompilerParams(
            dimension_semantics=("arbitrary", "arbitrary"),
            vmem_limit_bytes=vmem_limit),
    )(*xs_args, w_k)

    inv_n = 1.0 / float(B * Ho * Wo)
    mean = s_sum * inv_n
    var = jnp.maximum(s_sq * inv_n - mean * mean, 0.0)
    scale = g2 * jax.lax.rsqrt(var + eps)
    shift = b2 - mean * scale

    out_nhwc = pl.pallas_call(
        functools.partial(_kk_apply_kernel, k=k, Wo=Wo),
        out_shape=jax.ShapeDtypeStruct((B, Ho, Wo, C2), out_dtype),
        grid_spec=pltpu.PrefetchScalarGridSpec(
            num_scalar_prefetch=0,
            grid=(B, Ho),
            in_specs=x_specs + [w_spec,
                                pl.BlockSpec((1, C2), lambda b, h: (0, 0)),
                                pl.BlockSpec((1, C2), lambda b, h: (0, 0))],
            out_specs=pl.BlockSpec((None, None, Wo, C2), lambda b, h: (b, h, 0, 0)),
        ),
        compiler_params=pltpu.CompilerParams(
            dimension_semantics=("parallel", "parallel"),
            vmem_limit_bytes=vmem_limit),
    )(*xs_args, w_k, scale, shift)
    return jnp.transpose(out_nhwc, (0, 3, 1, 2))


def conv_m_a_forward(x, weight, gamma, beta, *, k=1, s=1, p=None, g=1,
                     eps=1e-5, force_general=False, max_tm=None):
    """Equivalent of Conv_m_a.forward (training-mode BN batch statistics).

    TODO(synk): BatchNorm running_mean/running_var momentum buffer updates (a
    training-time side effect, not part of the returned tensor) are not modeled.
    """
    if p is None:
        p = k // 2                                    # autopad
    if g != 1:
        # TODO(synk): grouped conv (g>1) not implemented (module default g=1).
        raise NotImplementedError("grouped conv (g>1) not implemented")
    vmem_limit = _vmem_limit_bytes()
    if k == 1:
        return _forward_1x1(x, weight, gamma, beta, s=s, p=p, eps=eps,
                            force_general=force_general, max_tm=max_tm,
                            vmem_limit=vmem_limit)
    if s != 1:
        # TODO(synk): k>1 with stride>1 not implemented (needs strided lane slices).
        raise NotImplementedError("k>1 with stride>1 not implemented")
    return _forward_kxk(x, weight, gamma, beta, k=k, p=p, eps=eps,
                        vmem_limit=vmem_limit)


# --------------------------- plain-JAX reference -------------------------------
def reference_forward(x, weight, gamma, beta, *, k=1, s=1, p=None, eps=1e-5):
    if p is None:
        p = k // 2
    y = jax.lax.conv_general_dilated(
        x, weight, (s, s), [(p, p), (p, p)],
        dimension_numbers=("NCHW", "OIHW", "NCHW"))
    mean = y.mean(axis=(0, 2, 3), keepdims=True)
    var = y.var(axis=(0, 2, 3), keepdims=True)       # biased, like BN training
    z = (y - mean) / jnp.sqrt(var + eps)
    z = z * gamma.reshape(1, -1, 1, 1) + beta.reshape(1, -1, 1, 1)
    return z * jax.nn.sigmoid(z)


# ------------------------------------ main -------------------------------------
if __name__ == "__main__":
    key = jax.random.PRNGKey(0)
    kx, kw, kg, kb, kx2, kw2, kx3 = jax.random.split(key, 7)

    # Conv_m_a defaults: k=1, s=1, p=autopad(1)=0
    B, C1, C2, H, W = 2, 4, 8, 16, 16
    x = jax.random.normal(kx, (B, C1, H, W), jnp.float32)
    weight = 0.1 * jax.random.normal(kw, (C2, C1, 1, 1), jnp.float32)
    gamma = 1.0 + 0.1 * jax.random.normal(kg, (C2,), jnp.float32)
    beta = 0.1 * jax.random.normal(kb, (C2,), jnp.float32)

    # 1) k=1 fused single-kernel fast path (NCHW-native, no transposes/pads).
    ref = reference_forward(x, weight, gamma, beta, k=1, s=1)
    out = jax.block_until_ready(conv_m_a_forward(x, weight, gamma, beta, k=1, s=1))
    assert out.shape == ref.shape == (B, C2, H, W)
    assert jnp.allclose(out, ref, atol=1e-2, rtol=1e-2), "k=1 fast path mismatch"

    # 2) k=1 general two-pass path (stats + recompute) with ragged M, forced
    #    small tiles so the 2-way core split, overlap dedup and column mask
    #    are all exercised.
    H3 = W3 = 24
    x3 = jax.random.normal(kx3, (B, C1, H3, W3), jnp.float32)
    ref3 = reference_forward(x3, weight, gamma, beta, k=1, s=1)
    out3 = jax.block_until_ready(
        conv_m_a_forward(x3, weight, gamma, beta, k=1, s=1,
                         force_general=True, max_tm=128))
    assert out3.shape == ref3.shape == (B, C2, H3, W3)
    assert jnp.allclose(out3, ref3, atol=1e-2, rtol=1e-2), "k=1 general path mismatch"

    # 3) k=3 path: in-kernel im2col via k row-slab views (no patch matrix in HBM).
    x2 = jax.random.normal(kx2, (B, C1, H, W), jnp.float32)
    w3 = 0.1 * jax.random.normal(kw2, (C2, C1, 3, 3), jnp.float32)
    ref2 = reference_forward(x2, w3, gamma, beta, k=3, s=1)
    out2 = jax.block_until_ready(conv_m_a_forward(x2, w3, gamma, beta, k=3, s=1))
    assert out2.shape == ref2.shape == (B, C2, H, W)
    assert jnp.allclose(out2, ref2, atol=1e-2, rtol=1e-2), "k=3 path mismatch"

    print("KERNEL_OK")
</pallas_src>

<mosaic_0001>
module attributes {stable_mosaic.version = 11 : i64} {
  func.func @_k1_fused_kernel(%arg0: memref<2x4x256xf32, #tpu.memory_space<vmem>>, %arg1: memref<8x4xf32, #tpu.memory_space<vmem>>, %arg2: memref<8x1xf32, #tpu.memory_space<vmem>>, %arg3: memref<8x1xf32, #tpu.memory_space<vmem>>, %arg4: memref<2x8x256xf32, #tpu.memory_space<vmem>>) attributes {dimension_semantics = [], scalar_prefetch = 0 : i64, scratch_operands = 0 : i64, tpu.core_type = #tpu.core_type<tc>} {
    %c0 = arith.constant 0 : index
    %c0_0 = arith.constant 0 : index
    %0 = vector.load %arg1[%c0, %c0_0] : memref<8x4xf32, #tpu.memory_space<vmem>>, vector<8x4xf32>
    %cst = arith.constant 0.000000e+00 : f32
    %1 = vector.broadcast %cst : f32 to vector<8x1xf32>
    %cst_1 = arith.constant 0.000000e+00 : f32
    %2 = vector.broadcast %cst_1 : f32 to vector<8x1xf32>
    %c0_2 = arith.constant 0 : index
    %c0_3 = arith.constant 0 : index
    %c0_4 = arith.constant 0 : index
    %3 = vector.load %arg0[%c0_2, %c0_3, %c0_4] : memref<2x4x256xf32, #tpu.memory_space<vmem>>, vector<1x4x256xf32>
    %4 = vector.shape_cast %3 : vector<1x4x256xf32> to vector<4x256xf32>
    %cst_5 = arith.constant dense<0.000000e+00> : vector<8x256xf32>
    %5 = tpu.matmul %0, %4, %cst_5 {dimension_numbers = #tpu.dot_dimension_numbers<[1], [0], [0], [1], [0, 0, 1, 1], [], []>} : vector<8x4xf32>, vector<4x256xf32>, vector<8x256xf32> -> vector<8x256xf32>
    %cst_6 = arith.constant dense<0.000000e+00> : vector<8xf32>
    %6 = vector.multi_reduction <add>, %5, %cst_6 [1] : vector<8x256xf32> to vector<8xf32>
    %7 = vector.shape_cast %6 : vector<8xf32> to vector<8x1xf32>
    %8 = arith.addf %1, %7 : vector<8x1xf32>
    %9 = arith.mulf %5, %5 : vector<8x256xf32>
    %cst_7 = arith.constant dense<0.000000e+00> : vector<8xf32>
    %10 = vector.multi_reduction <add>, %9, %cst_7 [1] : vector<8x256xf32> to vector<8xf32>
    %11 = vector.shape_cast %10 : vector<8xf32> to vector<8x1xf32>
    %12 = arith.addf %2, %11 : vector<8x1xf32>
    %c1 = arith.constant 1 : index
    %c0_8 = arith.constant 0 : index
    %c0_9 = arith.constant 0 : index
    %13 = vector.load %arg0[%c1, %c0_8, %c0_9] : memref<2x4x256xf32, #tpu.memory_space<vmem>>, vector<1x4x256xf32>
    %14 = vector.shape_cast %13 : vector<1x4x256xf32> to vector<4x256xf32>
    %cst_10 = arith.constant dense<0.000000e+00> : vector<8x256xf32>
    %15 = tpu.matmul %0, %14, %cst_10 {dimension_numbers = #tpu.dot_dimension_numbers<[1], [0], [0], [1], [0, 0, 1, 1], [], []>} : vector<8x4xf32>, vector<4x256xf32>, vector<8x256xf32> -> vector<8x256xf32>
    %cst_11 = arith.constant dense<0.000000e+00> : vector<8xf32>
    %16 = vector.multi_reduction <add>, %15, %cst_11 [1] : vector<8x256xf32> to vector<8xf32>
    %17 = vector.shape_cast %16 : vector<8xf32> to vector<8x1xf32>
    %18 = arith.addf %8, %17 : vector<8x1xf32>
    %19 = arith.mulf %15, %15 : vector<8x256xf32>
    %cst_12 = arith.constant dense<0.000000e+00> : vector<8xf32>
    %20 = vector.multi_reduction <add>, %19, %cst_12 [1] : vector<8x256xf32> to vector<8xf32>
    %21 = vector.shape_cast %20 : vector<8xf32> to vector<8x1xf32>
    %22 = arith.addf %12, %21 : vector<8x1xf32>
    %cst_13 = arith.constant 0.001953125 : f32
    %23 = vector.broadcast %cst_13 : f32 to vector<8x1xf32>
    %24 = arith.mulf %18, %23 : vector<8x1xf32>
    %cst_14 = arith.constant 0.001953125 : f32
    %25 = vector.broadcast %cst_14 : f32 to vector<8x1xf32>
    %26 = arith.mulf %22, %25 : vector<8x1xf32>
    %27 = arith.mulf %24, %24 : vector<8x1xf32>
    %28 = arith.subf %26, %27 : vector<8x1xf32>
    %cst_15 = arith.constant 0.000000e+00 : f32
    %29 = vector.broadcast %cst_15 : f32 to vector<8x1xf32>
    %30 = arith.maximumf %28, %29 : vector<8x1xf32>
    %c0_16 = arith.constant 0 : index
    %c0_17 = arith.constant 0 : index
    %31 = vector.load %arg2[%c0_16, %c0_17] : memref<8x1xf32, #tpu.memory_space<vmem>>, vector<8x1xf32>
    %cst_18 = arith.constant 9.99999974E-6 : f32
    %32 = vector.broadcast %cst_18 : f32 to vector<8x1xf32>
    %33 = arith.addf %30, %32 : vector<8x1xf32>
    %34 = math.rsqrt %33 : vector<8x1xf32>
    %35 = arith.mulf %31, %34 : vector<8x1xf32>
    %c0_19 = arith.constant 0 : index
    %c0_20 = arith.constant 0 : index
    %36 = vector.load %arg3[%c0_19, %c0_20] : memref<8x1xf32, #tpu.memory_space<vmem>>, vector<8x1xf32>
    %37 = arith.mulf %24, %35 : vector<8x1xf32>
    %38 = arith.subf %36, %37 : vector<8x1xf32>
    %39 = vector.broadcast %35 : vector<8x1xf32> to vector<8x256xf32>
    %40 = arith.mulf %5, %39 : vector<8x256xf32>
    %41 = vector.broadcast %38 : vector<8x1xf32> to vector<8x256xf32>
    %42 = arith.addf %40, %41 : vector<8x256xf32>
    %43 = arith.negf %42 : vector<8x256xf32>
    %44 = math.exp %43 : vector<8x256xf32>
    %cst_21 = arith.constant 1.000000e+00 : f32
    %45 = vector.broadcast %cst_21 : f32 to vector<8x256xf32>
    %46 = arith.addf %45, %44 : vector<8x256xf32>
    %47 = arith.divf %45, %46 : vector<8x256xf32>
    %48 = arith.mulf %42, %47 : vector<8x256xf32>
    %c0_22 = arith.constant 0 : index
    %c0_23 = arith.constant 0 : index
    %c0_24 = arith.constant 0 : index
    %49 = vector.load %arg4[%c0_22, %c0_23, %c0_24] : memref<2x8x256xf32, #tpu.memory_space<vmem>>, vector<1x8x256xf32>
    %50 = vector.shape_cast %49 : vector<1x8x256xf32> to vector<8x256xf32>
    %51 = vector.shape_cast %48 : vector<8x256xf32> to vector<1x8x256xf32>
    tpu.vector_store %arg4[%c0_22, %c0_23, %c0_24], %51 {strides = array<i32>} : memref<2x8x256xf32, #tpu.memory_space<vmem>>, vector<1x8x256xf32>,
    %52 = vector.broadcast %35 : vector<8x1xf32> to vector<8x256xf32>
    %53 = arith.mulf %15, %52 : vector<8x256xf32>
    %54 = vector.broadcast %38 : vector<8x1xf32> to vector<8x256xf32>
    %55 = arith.addf %53, %54 : vector<8x256xf32>
    %56 = arith.negf %55 : vector<8x256xf32>
    %57 = math.exp %56 : vector<8x256xf32>
    %cst_25 = arith.constant 1.000000e+00 : f32
    %58 = vector.broadcast %cst_25 : f32 to vector<8x256xf32>
    %59 = arith.addf %58, %57 : vector<8x256xf32>
    %60 = arith.divf %58, %59 : vector<8x256xf32>
    %61 = arith.mulf %55, %60 : vector<8x256xf32>
    %c1_26 = arith.constant 1 : index
    %c0_27 = arith.constant 0 : index
    %c0_28 = arith.constant 0 : index
    %62 = vector.load %arg4[%c1_26, %c0_27, %c0_28] : memref<2x8x256xf32, #tpu.memory_space<vmem>>, vector<1x8x256xf32>
    %63 = vector.shape_cast %62 : vector<1x8x256xf32> to vector<8x256xf32>
    %64 = vector.shape_cast %61 : vector<8x256xf32> to vector<1x8x256xf32>
    tpu.vector_store %arg4[%c1_26, %c0_27, %c0_28], %64 {strides = array<i32>} : memref<2x8x256xf32, #tpu.memory_space<vmem>>, vector<1x8x256xf32>,
    return
  }
}

</mosaic_0001>

<llo_original>
// kernel: tpu_custom_call.1
$region0: #{tpu_custom_call.1}
  #allocation0 [shape = 'u32[]', space=smem, size = 0x4, offset = 0x4, fixed_abs, tag = 'smem constant byte address 0x4 - core index']
  #allocation1 [shape = 'u32[72,128]{1,0:T(1,128)}', space=vmem, size = 0x9000, scoped, tag = 'internal scratch']
  %s0 = inlined_call_operand.vmem [shape: f32[2,4,256], index: 0, kind: input, shape index: {}]
  %s1 = inlined_call_operand.vmem [shape: f32[8,4], index: 1, kind: input, shape index: {}]
  %s2 = inlined_call_operand.vmem [shape: f32[8,1], index: 2, kind: input, shape index: {}]
  %s3 = inlined_call_operand.vmem [shape: f32[8,1], index: 3, kind: input, shape index: {}]
  %s4 = inlined_call_operand.hbm [shape: f32[2,8,256], index: 4, kind: output, shape index: {}]
  %s5 = sld [smem:[#allocation0]]
  $region26: #{tpu_custom_call.1} parent=0
    _
  %s7 = ssub.s32 1, %s5
  %s8 = scalar_select 0, %s7, %s5
  $region1: #{tpu_custom_call.1} parent=0
    #allocation2 [shape = 'u8[16384]{0}', space=vmem, size = 0x4000, scoped, tag = 'output window, operand 0, single buffered']
    #allocation3 [shape = 's32[1]{0}', space=sflag, size = 0x4, scoped, tag = 'scoped memory for tpu_custom_call.1']
    %9 = vsyncpa [#allocation3], 0
    // Predicated region
    $region2: #{tpu_custom_call.1} parent=1 // pred_check
      _
    $region3: #{tpu_custom_call.1} parent=1 // pred_check_branch
      %11 = sbr.rel (0) target = $region5
    $region4: #{tpu_custom_call.1} parent=1 // pred_region
      _
    $region5: #{tpu_custom_call.1} parent=1 // pred_fallthru
      _
    // Predicated region
    $region6: #{tpu_custom_call.1} parent=1 // pred_check
      _
    $region7: #{tpu_custom_call.1} parent=1 // pred_check_branch
      %13 = sbr.rel (0) target = $region9
    $region8: #{tpu_custom_call.1} parent=1 // pred_region
      _
    $region9: #{tpu_custom_call.1} parent=1 // pred_fallthru
      _
    // Predicated region
    $region10: #{tpu_custom_call.1} parent=1 // pred_check
      _
    $region11: #{tpu_custom_call.1} parent=1 // pred_check_branch
      %15 = sbr.rel (0) target = $region13
    $region12: #{tpu_custom_call.1} parent=1 // pred_region
      _
    $region13: #{tpu_custom_call.1} parent=1 // pred_fallthru
      _
    // Predicated region
    $region14: #{tpu_custom_call.1} parent=1 // pred_check
      _
    $region15: #{tpu_custom_call.1} parent=1 // pred_check_branch
      %17 = sbr.rel (0) target = $region17
    $region16: #{tpu_custom_call.1} parent=1 // pred_region
      _
    $region17: #{tpu_custom_call.1} parent=1 // pred_fallthru
      _
    %v18 = vld [vmem:[%s1] sm:$0xff]
    %v19 = vld [vmem:[%s0] sm:$0xff]
    %21 = vst [vmem:[#allocation1] ss:$2 sm:$0xff] %v19
    %v22 = vld.sshfl [vmem:[#allocation1] sm:$0xff pattern:$0x75316420]
    %v23 = vld.sshfl [vmem:[#allocation1 + $0x8] sm:$0xff pattern:$0x75316420]
    %vm24 = vcmask 31744
    %v26 = vsel %vm24, %v18, 0
    %vm28 = vcmask 1043456
    %v29 = vsel %vm28, %v22, 0
    %v31 = vsel %vm28, %v23, 0
    %33 = vmatpush.msra.mxu0 0.0
    %34 = vmatpush.msra.mxu0 0.0
    %35 = vmatpush.msra.mxu0 0.0
    %36 = vmatpush.msra.mxu0 0.0
    %37 = vmatpush.msra.mxu0 0.0
    %38 = vmatpush.msra.mxu0 0.0
    %39 = vmatpush.msra.mxu0 0.0
    %40 = vmatpush.msra.mxu0 0.0
    %41 = vmatpush.msra.mxu0 0.0
    %42 = vmatpush.msra.mxu0 0.0
    %43 = vmatpush.msra.mxu0 0.0
    %44 = vmatpush.msra.mxu0 0.0
    %45 = vmatpush.msra.mxu0 0.0
    %46 = vmatpush.msra.mxu0 0.0
    %47 = vmatpush.msra.mxu0 0.0
    %48 = vmatpush.msra.mxu0 %v29
    %49 = vmatmul.f32.gmra.mxu0 %v26
    %v50 = vpop.f32.mrf.mxu0
    %v51 = vadd.f32 0.0, %v50
    %52 = vdwg.mxu0
    %53 = vmatpush.msra.mxu0 0.0
    %54 = vmatpush.msra.mxu0 0.0
    %55 = vmatpush.msra.mxu0 0.0
    %56 = vmatpush.msra.mxu0 0.0
    %57 = vmatpush.msra.mxu0 0.0
    %58 = vmatpush.msra.mxu0 0.0
    %59 = vmatpush.msra.mxu0 0.0
    %60 = vmatpush.msra.mxu0 0.0
    %61 = vmatpush.msra.mxu0 0.0
    %62 = vmatpush.msra.mxu0 0.0
    %63 = vmatpush.msra.mxu0 0.0
    %64 = vmatpush.msra.mxu0 0.0
    %65 = vmatpush.msra.mxu0 0.0
    %66 = vmatpush.msra.mxu0 0.0
    %67 = vmatpush.msra.mxu0 0.0
    %68 = vmatpush.msra.mxu0 %v31
    %69 = vmatmul.f32.gmra.mxu0 %v26
    %v70 = vpop.f32.mrf.mxu0
    %v71 = vadd.f32 0.0, %v70
    %72 = vdwg.mxu0
    %v73 = vadd.f32 %v51, %v71
    %74 = vadd.xlane.f32.xlu0 %v73
    %v75 = vpop.xlane.xlu0 %74
    %v76 = vadd.f32 %v75, 0.0
    %v77 = vmul.f32 %v51, %v51
    %v78 = vmul.f32 %v71, %v71
    %v79 = vadd.f32 %v77, %v78
    %80 = vadd.xlane.f32.xlu0 %v79
    %v81 = vpop.xlane.xlu0 %80
    %v82 = vadd.f32 %v81, 0.0
    %s83 = scalar_lea.vmem %s0, 8
    %v84 = vld [vmem:[%s83] sm:$0xff]
    %86 = vst [vmem:[#allocation1] ss:$2 sm:$0xff] %v84
    %v87 = vld.sshfl [vmem:[#allocation1] sm:$0xff pattern:$0x75316420]
    %v88 = vld.sshfl [vmem:[#allocation1 + $0x8] sm:$0xff pattern:$0x75316420]
    %v89 = vsel %vm28, %v87, 0
    %v91 = vsel %vm28, %v88, 0
    %93 = vmatpush.msra.mxu0 0.0
    %94 = vmatpush.msra.mxu0 0.0
    %95 = vmatpush.msra.mxu0 0.0
    %96 = vmatpush.msra.mxu0 0.0
    %97 = vmatpush.msra.mxu0 0.0
    %98 = vmatpush.msra.mxu0 0.0
    %99 = vmatpush.msra.mxu0 0.0
    %100 = vmatpush.msra.mxu0 0.0
    %101 = vmatpush.msra.mxu0 0.0
    %102 = vmatpush.msra.mxu0 0.0
    %103 = vmatpush.msra.mxu0 0.0
    %104 = vmatpush.msra.mxu0 0.0
    %105 = vmatpush.msra.mxu0 0.0
    %106 = vmatpush.msra.mxu0 0.0
    %107 = vmatpush.msra.mxu0 0.0
    %108 = vmatpush.msra.mxu0 %v89
    %109 = vmatmul.f32.gmra.mxu0 %v26
    %v110 = vpop.f32.mrf.mxu0
    %v111 = vadd.f32 0.0, %v110
    %112 = vdwg.mxu0
    %113 = vmatpush.msra.mxu0 0.0
    %114 = vmatpush.msra.mxu0 0.0
    %115 = vmatpush.msra.mxu0 0.0
    %116 = vmatpush.msra.mxu0 0.0
    %117 = vmatpush.msra.mxu0 0.0
    %118 = vmatpush.msra.mxu0 0.0
    %119 = vmatpush.msra.mxu0 0.0
    %120 = vmatpush.msra.mxu0 0.0
    %121 = vmatpush.msra.mxu0 0.0
    %122 = vmatpush.msra.mxu0 0.0
    %123 = vmatpush.msra.mxu0 0.0
    %124 = vmatpush.msra.mxu0 0.0
    %125 = vmatpush.msra.mxu0 0.0
    %126 = vmatpush.msra.mxu0 0.0
    %127 = vmatpush.msra.mxu0 0.0
    %128 = vmatpush.msra.mxu0 %v91
    %129 = vmatmul.f32.gmra.mxu0 %v26
    %v130 = vpop.f32.mrf.mxu0
    %v131 = vadd.f32 0.0, %v130
    %132 = vdwg.mxu0
    %v133 = vadd.f32 %v111, %v131
    %134 = vadd.xlane.f32.xlu0 %v133
    %v135 = vpop.xlane.xlu0 %134
    %v136 = vadd.f32 %v76, %v135
    %v137 = vmul.f32 %v111, %v111
    %v138 = vmul.f32 %v131, %v131
    %v139 = vadd.f32 %v137, %v138
    %140 = vadd.xlane.f32.xlu0 %v139
    %v141 = vpop.xlane.xlu0 %140
    %v142 = vadd.f32 %v82, %v141
    %v143 = vmul.f32 %v136, 0.001953125
    %v144 = vmul.f32 %v142, 0.001953125
    %v145 = vmul.f32 %v143, %v143
    %v146 = vsub.f32 %v144, %v145
    %v147 = vmax.f32 %v146, 0.0
    %v148 = vld [vmem:[%s2] sm:$0xff]
    %v149 = vadd.f32 %v147, 1e-05
    %v150 = vrsqrt.pop %v149
    %v151 = vmul.f32 %v150, %v149
    %v152 = vmul.f32 %v151, %v150
    %v153 = vmul.f32 0.5, %v152
    %v154 = vsub.f32 1.5, %v153
    %v155 = vmul.f32 %v150, %v154
    %vm156 = vweird.f32 %v149
    %vm157 = vweird.f32 %v150
    %vm158 = vmor %vm156, %vm157
    %v159 = vsel %vm158, %v150, %v155
    %v160 = vmul.f32 %v148, %v159
    %v161 = vld [vmem:[%s3] sm:$0xff]
    %v162 = vmul.f32 %v143, %v160
    %v163 = vsub.f32 %v161, %v162
    %165 = vset.pattern.permute.xlu0 0
    %166 = vperm.xlu0 %165, %v160
    %v167 = vpop.permute.xlu0 %166
    %v169 = vmul.f32 %v51, %v167
    %v170 = vmul.f32 %v71, %v167
    %172 = vset.pattern.permute.xlu0 0
    %173 = vperm.xlu0 %172, %v163
    %v174 = vpop.permute.xlu0 %173
    %v176 = vadd.f32 %v169, %v174
    %v177 = vadd.f32 %v170, %v174
    %v178 = vxor.u32 %v176, 2147483648
    %v179 = vxor.u32 %v177, 2147483648
    %v180 = vmul.f32 %v178, 1.442695
    %v181 = vpow.pop %v180
    %v182 = vmul.f32 %v179, 1.442695
    %v183 = vpow.pop %v182
    %v184 = vadd.f32 %v181, 1.0
    %v185 = vadd.f32 %v183, 1.0
    %v186 = vrcp.pop %v184
    %v187 = vmul.f32 %v184, %v186
    %v188 = vsub.f32 1.0, %v187
    %v189 = vmul.f32 %v186, %v188
    %v190 = vadd.f32 %v186, %v189
    %vm191 = vweird.f32 %v184
    %vm192 = vweird.f32 %v186
    %vm193 = vmor %vm191, %vm192
    %v194 = vsel %vm193, %v186, %v190
    %v195 = vand.u32 2147483647, %v184
    %vm196 = vcmp.eq.f32.partialorder %v195, 8.507059e+37
    %v197 = vand.u32 %v184, 2147483648
    %v198 = vor.u32 1.1754944e-38, %v197
    %v199 = vsel %vm196, %v198, %v194
    %v200 = vmul.f32 1.0, %v199
    %v201 = vrcp.pop %v185
    %v202 = vmul.f32 %v185, %v201
    %v203 = vsub.f32 1.0, %v202
    %v204 = vmul.f32 %v201, %v203
    %v205 = vadd.f32 %v201, %v204
    %vm206 = vweird.f32 %v185
    %vm207 = vweird.f32 %v201
    %vm208 = vmor %vm206, %vm207
    %v209 = vsel %vm208, %v201, %v205
    %v210 = vand.u32 2147483647, %v185
    %vm211 = vcmp.eq.f32.partialorder %v210, 8.507059e+37
    %v212 = vand.u32 %v185, 2147483648
    %v213 = vor.u32 1.1754944e-38, %v212
    %v214 = vsel %vm211, %v213, %v209
    %v215 = vmul.f32 1.0, %v214
    %v216 = vmul.f32 %v176, %v200
    %v217 = vmul.f32 %v177, %v215
    %218 = vst [vmem:[#allocation2] sm:$0xff] %v216
    %219 = vst [vmem:[#allocation2 + $0x8] sm:$0xff] %v217
    %v220 = vmul.f32 %v111, %v167
    %v221 = vmul.f32 %v131, %v167
    %v222 = vadd.f32 %v220, %v174
    %v223 = vadd.f32 %v221, %v174
    %v224 = vxor.u32 %v222, 2147483648
    %v225 = vxor.u32 %v223, 2147483648
    %v226 = vmul.f32 %v224, 1.442695
    %v227 = vpow.pop %v226
    %v228 = vmul.f32 %v225, 1.442695
    %v229 = vpow.pop %v228
    %v230 = vadd.f32 %v227, 1.0
    %v231 = vadd.f32 %v229, 1.0
    %v232 = vrcp.pop %v230
    %v233 = vmul.f32 %v230, %v232
    %v234 = vsub.f32 1.0, %v233
    %v235 = vmul.f32 %v232, %v234
    %v236 = vadd.f32 %v232, %v235
    %vm237 = vweird.f32 %v230
    %vm238 = vweird.f32 %v232
    %vm239 = vmor %vm237, %vm238
    %v240 = vsel %vm239, %v232, %v236
    %v241 = vand.u32 2147483647, %v230
    %vm242 = vcmp.eq.f32.partialorder %v241, 8.507059e+37
    %v243 = vand.u32 %v230, 2147483648
    %v244 = vor.u32 1.1754944e-38, %v243
    %v245 = vsel %vm242, %v244, %v240
    %v246 = vmul.f32 1.0, %v245
    %v247 = vrcp.pop %v231
    %v248 = vmul.f32 %v231, %v247
    %v249 = vsub.f32 1.0, %v248
    %v250 = vmul.f32 %v247, %v249
    %v251 = vadd.f32 %v247, %v250
    %vm252 = vweird.f32 %v231
    %vm253 = vweird.f32 %v247
    %vm254 = vmor %vm252, %vm253
    %v255 = vsel %vm254, %v247, %v251
    %v256 = vand.u32 2147483647, %v231
    %vm257 = vcmp.eq.f32.partialorder %v256, 8.507059e+37
    %v258 = vand.u32 %v231, 2147483648
    %v259 = vor.u32 1.1754944e-38, %v258
    %v260 = vsel %vm257, %v259, %v255
    %v261 = vmul.f32 1.0, %v260
    %v262 = vmul.f32 %v222, %v246
    %v263 = vmul.f32 %v223, %v261
    %s264 = scalar_lea.vmem [#allocation2], 16
    %265 = vst [vmem:[%s264] sm:$0xff] %v262
    %266 = vst [vmem:[%s264 + $0x8] sm:$0xff] %v263
    // Predicated region
    $region18: #{tpu_custom_call.1} parent=1 // pred_check
      _
    $region19: #{tpu_custom_call.1} parent=1 // pred_check_branch
      %268 = sbr.rel (0) target = $region21
    $region20: #{tpu_custom_call.1} parent=1 // pred_region
      %270 = vsyncadd [#allocation3], 0
      %s271 = sshll.u32 [#allocation2], 4
      %s272 = int_to_ptr.vmem [resolvable:$true] %s271
      %s273 = sshll.u32 %s4, 4
      %s274 = int_to_ptr.hbm [resolvable:$true] %s273
      %279 = dma.vmem_to_hbm [thread:$0]  %s272, 512, %s274, [#allocation3], 256, 256, 16
    $region21: #{tpu_custom_call.1} parent=1 // pred_fallthru
      _
    // Predicated region
    $region22: #{tpu_custom_call.1} parent=1 // pred_check
      _
    $region23: #{tpu_custom_call.1} parent=1 // pred_check_branch
      %281 = sbr.rel (0) target = $region25
    $region24: #{tpu_custom_call.1} parent=1 // pred_region
      %283 = dma.done [#allocation3], 512
    $region25: #{tpu_custom_call.1} parent=1 // pred_fallthru
      _
    %284 = vsyncpa [#allocation3], 1

</llo_original>
